<compile_context>
chip_gen: v6e
topology: v6e:2x2x1
jax: 0.10.0
libtpu: 0.0.40
codegen_flags: <defaults>
</compile_context>

<pallas_src>
import jax
import jax.numpy as jnp
from jax.experimental import pallas as pl
from jax.experimental.pallas import tpu as pltpu

_LANES = 128
_PAIR = 2 * _LANES            # 256 interleaved lanes = 128 (protocol, day) pairs
_SUB = 16                     # row-tile multiple (valid for f32 and bf16 tiling)
_SMALL_N_THRESHOLD = 1 << 20  # below this, a single fused XLA elementwise op wins


def _round_up(a, m):
    return ((a + m - 1) // m) * m


def _asymptotic_kernel(a_ref, x_ref, s_ref, o_ref):
    # a_ref : SMEM f32[1]              -> A = 1 - sigmoid(b)
    # x_ref : VMEM f32[tile_rows, 256] -> native interleaved layout (p0,d0,p1,d1,...)
    # s_ref : VMEM f32[256, 128]       -> de-interleave matrix, betas folded in
    # o_ref : VMEM   [tile_rows, 128]  -> predicted accuracy, lane-dense
    #
    # z[r, j] = beta_protocol * protocol[r, j] + (beta_time / 100) * day[r, j]
    # (one MXU op does the de-interleave + weighted pair-sum; MXU is idle here)
    z = jnp.dot(x_ref[...], s_ref[...],
                preferred_element_type=jnp.float32,
                precision=jax.lax.Precision.HIGHEST)
    k = jnp.exp(z)
    A = a_ref[0]
    # A*(1 - exp(-k)) + b == 1 - A*exp(-k)   (since A + b == 1)
    o_ref[...] = (1.0 - A * jnp.exp(-k)).astype(o_ref.dtype)


def asymptotic_model_forward(x, beta_protocol, beta_time, b, *,
                             max_tile_rows=2048,
                             out_dtype=jnp.float32,
                             core_parallel=False,
                             force_pallas=False):
    """x: f32[N, 2] = (protocol, days). Returns predicted accuracy of shape (N,)."""
    x = jnp.asarray(x, jnp.float32)
    n = x.shape[0]

    # Hoisted scalar math (done once in the wrapper, never per grid step).
    beta_p = jnp.asarray(beta_protocol, jnp.float32).reshape(())
    beta_t = jnp.asarray(beta_time, jnp.float32).reshape(())
    b_s = jax.nn.sigmoid(jnp.asarray(b, jnp.float32).reshape(()))
    A = 1.0 - b_s

    if n == 0:
        return jnp.zeros((0,), out_dtype)

    if n < _SMALL_N_THRESHOLD and not force_pallas:
        protocols = x[:, 0]
        days = x[:, 1]
        k = jnp.exp(beta_p * protocols + beta_t * days / 100.0)
        return (1.0 - A * jnp.exp(-k)).astype(out_dtype)

    # --- zero-copy layout: (N, 2) row-major IS (N//128, 256) interleaved ---
    n_pad = _round_up(n, _LANES)
    if n_pad != n:
        # TODO(synk): ragged N costs one pad copy (in) + one slice copy (out);
        # callers wanting the true zero-copy path should supply N % 128 == 0.
        x = jnp.pad(x, ((0, n_pad - n), (0, 0)))
    rows = n_pad // _LANES
    xt = x.reshape(rows, _PAIR)            # free: contiguous reinterpretation

    # Tile selection: multiple of 16 rows; big tiles amortize per-step overhead.
    max_tile_rows = max(_SUB, (int(max_tile_rows) // _SUB) * _SUB)
    tile_rows = min(max_tile_rows, _round_up(rows, _SUB))
    num_tiles = pl.cdiv(rows, tile_rows)   # last block may be partial (masked writeback)

    # De-interleave matrix with the GLM coefficients folded in:
    #   S[2j, j] = beta_protocol, S[2j+1, j] = beta_time / 100
    eye = jnp.eye(_LANES, dtype=jnp.float32)
    s_mat = jnp.stack([beta_p * eye, (beta_t / 100.0) * eye],
                      axis=1).reshape(_PAIR, _LANES)

    a_param = jnp.reshape(A, (1,))         # -> SMEM

    core_sem = getattr(pltpu, "CORE_PARALLEL", None)
    if core_parallel and core_sem is not None and num_tiles >= 2:
        dim_sems = (core_sem,)             # v7x: split row-tiles across both TensorCores
    else:
        dim_sems = ("parallel",)

    out = pl.pallas_call(
        _asymptotic_kernel,
        out_shape=jax.ShapeDtypeStruct((rows, _LANES), out_dtype),
        grid=(num_tiles,),
        in_specs=[
            pl.BlockSpec(memory_space=pltpu.MemorySpace.SMEM),        # A (scalar)
            pl.BlockSpec((tile_rows, _PAIR), lambda i: (i, 0)),       # x row-tiles
            pl.BlockSpec((_PAIR, _LANES), lambda i: (0, 0)),          # S (VMEM-resident)
        ],
        out_specs=pl.BlockSpec((tile_rows, _LANES), lambda i: (i, 0)),
        compiler_params=pltpu.CompilerParams(
            dimension_semantics=dim_sems,
            vmem_limit_bytes=32 * 1024 * 1024,   # >16 MiB (v5e default), <48 MiB (v7x cap)
        ),
    )(a_param, xt, s_mat)

    out_flat = out.reshape(-1)             # free (contiguous)
    return out_flat if n_pad == n else out_flat[:n]


def _reference_forward(x, beta_protocol, beta_time, b):
    # Mirrors the PyTorch module exactly.
    x = jnp.asarray(x, jnp.float32)
    b_s = jax.nn.sigmoid(jnp.asarray(b, jnp.float32))
    A = 1.0 - b_s
    protocols = x[:, 0]
    days = x[:, 1]
    k = jnp.exp(jnp.asarray(beta_protocol, jnp.float32) * protocols
                + jnp.asarray(beta_time, jnp.float32) * days / 100.0)
    return A * (1.0 - jnp.exp(-k * jnp.ones_like(protocols))) + b_s


if __name__ == "__main__":
    key = jax.random.PRNGKey(0)
    kp, kd = jax.random.split(key)
    n = 5120  # small: 40 rows of 128 samples -> multi-step grid + partial edge block
    protocols = jax.random.randint(kp, (n,), 1, 6).astype(jnp.float32)
    days = jax.random.randint(kd, (n,), 0, 120).astype(jnp.float32)
    x = jnp.stack([protocols, days], axis=1)  # (N, 2), the module's input layout

    # Case 1: nn.Module default init (beta_protocol=1, beta_time=0, b=0).
    # Case 2: non-trivial parameters exercising every term.
    cases = [(1.0, 0.0, 0.0), (0.75, -3.125, 0.25)]
    for beta_p, beta_t, b in cases:
        y = asymptotic_model_forward(x, beta_p, beta_t, b,
                                     force_pallas=True, max_tile_rows=16)
        jax.block_until_ready(y)
        y_ref = _reference_forward(x, beta_p, beta_t, b)
        assert y.shape == (n,)
        assert jnp.allclose(y, y_ref, atol=1e-5, rtol=1e-5), \
            float(jnp.max(jnp.abs(y - y_ref)))

    # Ragged N (not a multiple of 128) -> exercises pad + masked partial block.
    y_r = asymptotic_model_forward(x[:1000], 0.75, -3.125, 0.25, force_pallas=True)
    jax.block_until_ready(y_r)
    assert y_r.shape == (1000,)
    assert jnp.allclose(y_r, _reference_forward(x[:1000], 0.75, -3.125, 0.25),
                        atol=1e-5, rtol=1e-5)

    # Small-N XLA fallback path must agree too.
    y_s = asymptotic_model_forward(x[:8], 1.0, 0.0, 0.0)
    jax.block_until_ready(y_s)
    assert jnp.allclose(y_s, _reference_forward(x[:8], 1.0, 0.0, 0.0),
                        atol=1e-5, rtol=1e-5)

    print("KERNEL_OK")
</pallas_src>

<mosaic_0001>
module attributes {stable_mosaic.version = 11 : i64} {
  func.func @_asymptotic_kernel(%arg0: i32, %arg1: memref<1xf32, #tpu.memory_space<smem>>, %arg2: memref<16x256xf32, #tpu.memory_space<vmem>>, %arg3: memref<256x128xf32, #tpu.memory_space<vmem>>, %arg4: memref<16x128xf32, #tpu.memory_space<vmem>>) attributes {dimension_semantics = [#tpu.dimension_semantics<parallel>], iteration_bounds = array<i64: 3>, scalar_prefetch = 0 : i64, scratch_operands = 0 : i64, tpu.core_type = #tpu.core_type<tc>, window_params = [{transform_indices = @transform_0, window_bounds = array<i64: 1>}, {transform_indices = @transform_1, window_bounds = array<i64: 16, 256>}, {pipeline_mode = #tpu.pipeline_mode<synchronous>, transform_indices = @transform_2, window_bounds = array<i64: 256, 128>}, {transform_indices = @transform_3, window_bounds = array<i64: 16, 128>}]} {
    %c0 = arith.constant 0 : index
    %c0_0 = arith.constant 0 : index
    %0 = vector.load %arg2[%c0, %c0_0] : memref<16x256xf32, #tpu.memory_space<vmem>>, vector<16x256xf32>
    %c0_1 = arith.constant 0 : index
    %c0_2 = arith.constant 0 : index
    %1 = vector.load %arg3[%c0_1, %c0_2] : memref<256x128xf32, #tpu.memory_space<vmem>>, vector<256x128xf32>
    %cst = arith.constant dense<0.000000e+00> : vector<16x128xf32>
    %2 = tpu.matmul %0, %1, %cst {dimension_numbers = #tpu.dot_dimension_numbers<[1], [0], [0], [1], [0, 0, 1, 1], [], []>, precision = #tpu.contract_precision<fp32>} : vector<16x256xf32>, vector<256x128xf32>, vector<16x128xf32> -> vector<16x128xf32>
    %3 = math.exp %2 : vector<16x128xf32>
    %c0_3 = arith.constant 0 : index
    %4 = memref.load %arg1[%c0_3] : memref<1xf32, #tpu.memory_space<smem>>
    %cst_4 = arith.constant 0.000000e+00 : f32
    %5 = vector.broadcast %cst_4 : f32 to vector<16x128xf32>
    %6 = arith.subf %5, %3 : vector<16x128xf32>
    %7 = math.exp %6 : vector<16x128xf32>
    %8 = vector.broadcast %4 : f32 to vector<16x128xf32>
    %9 = arith.mulf %8, %7 : vector<16x128xf32>
    %cst_5 = arith.constant 1.000000e+00 : f32
    %10 = vector.broadcast %cst_5 : f32 to vector<16x128xf32>
    %11 = arith.subf %10, %9 : vector<16x128xf32>
    %c0_6 = arith.constant 0 : index
    %c0_7 = arith.constant 0 : index
    %12 = vector.load %arg4[%c0_6, %c0_7] : memref<16x128xf32, #tpu.memory_space<vmem>>, vector<16x128xf32>
    tpu.vector_store %arg4[%c0_6, %c0_7], %11 {strides = array<i32>} : memref<16x128xf32, #tpu.memory_space<vmem>>, vector<16x128xf32>,
    return
  }
  func.func @transform_0(%arg0: i32) -> i32 {
    %c0_i32 = arith.constant 0 : i32
    %c0_i32_0 = arith.constant 0 : i32
    return %c0_i32 : i32
  }
  func.func @transform_1(%arg0: i32) -> (i32, i32) {
    %c0_i32 = arith.constant 0 : i32
    %c0_i32_0 = arith.constant 0 : i32
    return %arg0, %c0_i32 : i32, i32
  }
  func.func @transform_2(%arg0: i32) -> (i32, i32) {
    %c0_i32 = arith.constant 0 : i32
    %c0_i32_0 = arith.constant 0 : i32
    %c0_i32_1 = arith.constant 0 : i32
    return %c0_i32, %c0_i32_0 : i32, i32
  }
  func.func @transform_3(%arg0: i32) -> (i32, i32) {
    %c0_i32 = arith.constant 0 : i32
    %c0_i32_0 = arith.constant 0 : i32
    return %arg0, %c0_i32 : i32, i32
  }
}

</mosaic_0001>

<llo_original>
// kernel: tpu_custom_call.1
$region0: #{tpu_custom_call.1}
  #allocation0 [shape = 'u32[]', space=smem, size = 0x4, offset = 0x4, fixed_abs, tag = 'smem constant byte address 0x4 - core index']
  #allocation1 [shape = 'u32[144,128]{1,0:T(1,128)}', space=vmem, size = 0x12000, scoped, tag = 'internal scratch']
  #allocation2 [shape = 'f32[1]{0:T(128)S(6)}', space=smem, size = 0x200, scoped, tag = 'scoped memory for tpu_custom_call.1']
  %s0 = inlined_call_operand.<no memory space> [shape: f32[1], index: 0, kind: input, shape index: {}]
  %s1 = inlined_call_operand.hbm [shape: f32[40,256], index: 1, kind: input, shape index: {}]
  %s2 = inlined_call_operand.hbm [shape: f32[256,128], index: 2, kind: input, shape index: {}]
  %s3 = inlined_call_operand.hbm [shape: f32[40,128], index: 3, kind: output, shape index: {}]
  %s4 = sld [smem:[#allocation0]]
  $region53: #{tpu_custom_call.1} parent=0
    _
  %s6 = ssub.s32 1, %s4
  %s7 = scalar_select 0, %s6, %s4
  %8 = sst [smem:[#allocation2]] %s0
  $region1: #{tpu_custom_call.1} parent=0
    #allocation3 [shape = 'u8[32768]{0}', space=vmem, size = 0x8000, scoped, tag = 'input window, operand 1']
    #allocation4 [shape = 's32[2]{0}', space=sflag, size = 0x8, scoped, tag = 'scoped memory for tpu_custom_call.1']
    #allocation5 [shape = 's32[2]{0}', space=sflag, size = 0x8, scoped, tag = 'scoped memory for tpu_custom_call.1']
    #allocation6 [shape = 'u8[131072]{0}', space=vmem, size = 0x20000, scoped, tag = 'input window, operand 2, single buffered']
    #allocation7 [shape = 's32[1]{0}', space=sflag, size = 0x4, scoped, tag = 'scoped memory for tpu_custom_call.1']
    #allocation8 [shape = 'u8[16384]{0}', space=vmem, size = 0x4000, scoped, tag = 'output window, operand 0']
    %9 = vsyncpa [#allocation4], 0
    %s10 = scalar_lea.sflag [#allocation4], 1
    %11 = vsyncpa %s10, 0
    %12 = vsyncpa [#allocation7], 0
    %13 = vsyncpa [#allocation5], 0
    %s14 = scalar_lea.sflag [#allocation5], 1
    %15 = vsyncpa %s14, 0
    loop: start=0, step=1, limit=5
    $region2: #{tpu_custom_call.1} parent=1 // loop_pre_header
      _
    $region3: #{tpu_custom_call.1} parent=1 // loop_header
      %s17 = sphi 0, %s21
      %p18 = scmp.ge.s32.totalorder %s17, 5
      %s25 = sphi 0, %s25
      %s27 = sphi 0, %s25
      %s28 = sphi 0, %s27
      %s42 = sphi 0, %s28
      %s48 = sphi 0, %s50
      %s51 = sphi 0, %s48
      %s52 = sphi 0, %s51
      %s68 = sphi 0, %s52
      %s72 = sphi 0, %s72
      %s74 = sphi 0, %s72
      %s75 = sphi 0, %s74
      %s89 = sphi 0, %s75
      %s95 = sphi 0, %s97
      %s98 = sphi 0, %s95
      %s99 = sphi 0, %s98
      %s115 = sphi 0, %s99
    $region4: #{tpu_custom_call.1} parent=1 // loop_header_branch
      %20 = sbr.rel (%p18) target = $region8
    $region5: #{tpu_custom_call.1} parent=1 // loop_body
      %s22 = ssub.s32 %s17, 1
      %s23 = ssub.s32 %s17, 2
      %s24 = sadd.s32 %s17, 1
      %s26 = sadd.s32 %s25, 1
      %p29 = scmp.eq.s32.totalorder %s17, 2
      %p30 = scmp.ne.s32.totalorder %s25, %s27
      %p31 = scmp.eq.s32.totalorder %s17, 0
      %p32 = por %p30, %p31
      %p33 = scmp.ne.s32.totalorder %s25, %s27
      %p34 = scmp.eq.s32.totalorder %s22, 2
      %p35 = por %p33, %p34
      %p36 = scmp.ne.s32.totalorder %s27, %s28
      %p37 = scmp.eq.s32.totalorder %s22, 0
      %p38 = por %p36, %p37
      %p39 = scmp.ne.s32.totalorder %s27, %s28
      %p40 = scmp.eq.s32.totalorder %s23, 2
      %p41 = por %p39, %p40
      %p43 = scmp.ne.s32.totalorder %s28, %s42
      %p44 = scmp.eq.s32.totalorder %s23, 0
      %p45 = por %p43, %p44
      %s46 = ssub.s32 %s17, %s24
      %p47 = scmp.eq.s32.totalorder %s46, 0
      %s49 = sadd.s32 %s48, 1
      %s50 = scalar_select %p47, %s48, %s49
      %p53 = pneg %p47
      %p54 = scmp.eq.s32.totalorder %s17, 2
      %p55 = por %p53, %p54
      %p56 = scmp.ne.s32.totalorder %s48, %s51
      %p57 = scmp.eq.s32.totalorder %s17, 0
      %p58 = por %p56, %p57
      %p59 = scmp.ne.s32.totalorder %s48, %s51
      %p60 = scmp.eq.s32.totalorder %s22, 2
      %p61 = por %p59, %p60
      %p62 = scmp.ne.s32.totalorder %s51, %s52
      %p63 = scmp.eq.s32.totalorder %s22, 0
      %p64 = por %p62, %p63
      %p65 = scmp.ne.s32.totalorder %s51, %s52
      %p66 = scmp.eq.s32.totalorder %s23, 2
      %p67 = por %p65, %p66
      %p69 = scmp.ne.s32.totalorder %s52, %s68
      %p70 = scmp.eq.s32.totalorder %s23, 0
      %p71 = por %p69, %p70
      %s73 = sadd.s32 %s72, 1
      %p76 = scmp.eq.s32.totalorder %s17, 2
      %p77 = scmp.ne.s32.totalorder %s72, %s74
      %p78 = scmp.eq.s32.totalorder %s17, 0
      %p79 = por %p77, %p78
      %p80 = scmp.ne.s32.totalorder %s72, %s74
      %p81 = scmp.eq.s32.totalorder %s22, 2
      %p82 = por %p80, %p81
      %p83 = scmp.ne.s32.totalorder %s74, %s75
      %p84 = scmp.eq.s32.totalorder %s22, 0
      %p85 = por %p83, %p84
      %p86 = scmp.ne.s32.totalorder %s74, %s75
      %p87 = scmp.eq.s32.totalorder %s23, 2
      %p88 = por %p86, %p87
      %p90 = scmp.ne.s32.totalorder %s75, %s89
      %p91 = scmp.eq.s32.totalorder %s23, 0
      %p92 = por %p90, %p91
      %s93 = ssub.s32 %s17, %s24
      %p94 = scmp.eq.s32.totalorder %s93, 0
      %s96 = sadd.s32 %s95, 1
      %s97 = scalar_select %p94, %s95, %s96
      %p100 = pneg %p94
      %p101 = scmp.eq.s32.totalorder %s17, 2
      %p102 = por %p100, %p101
      %p103 = scmp.ne.s32.totalorder %s95, %s98
      %p104 = scmp.eq.s32.totalorder %s17, 0
      %p105 = por %p103, %p104
      %p106 = scmp.ne.s32.totalorder %s95, %s98
      %p107 = scmp.eq.s32.totalorder %s22, 2
      %p108 = por %p106, %p107
      %p109 = scmp.ne.s32.totalorder %s98, %s99
      %p110 = scmp.eq.s32.totalorder %s22, 0
      %p111 = por %p109, %p110
      %p112 = scmp.ne.s32.totalorder %s98, %s99
      %p113 = scmp.eq.s32.totalorder %s23, 2
      %p114 = por %p112, %p113
      %p116 = scmp.ne.s32.totalorder %s99, %s115
      %p117 = scmp.eq.s32.totalorder %s23, 0
      %p118 = por %p116, %p117
      %p119 = scmp.le.s32.totalorder 1, %s17
      %p120 = scmp.lt.s32.totalorder %s17, 4
      %p121 = pnand %p119, %p120
      %p122 = pneg %p121
      // Predicated region
      $region9: #{tpu_custom_call.1} parent=5 // pred_check
        _
      $region10: #{tpu_custom_call.1} parent=5 // pred_check_branch
        %124 = sbr.rel (%p121) target = $region12
      $region11: #{tpu_custom_call.1} parent=5 // pred_region
        %s125 = ssub.s32 %s17, 1
        // Predicated region
        $region13: #{tpu_custom_call.1} parent=11 // pred_check
          %p126 = pneg %p38
        $region14: #{tpu_custom_call.1} parent=11 // pred_check_branch
          %128 = sbr.rel (%p126) target = $region16
        $region15: #{tpu_custom_call.1} parent=11 // pred_region
          _
        $region16: #{tpu_custom_call.1} parent=11 // pred_fallthru
          _
        // Predicated region
        $region17: #{tpu_custom_call.1} parent=11 // pred_check
          %p129 = pneg %p85
        $region18: #{tpu_custom_call.1} parent=11 // pred_check_branch
          %131 = sbr.rel (%p129) target = $region20
        $region19: #{tpu_custom_call.1} parent=11 // pred_region
          %s133 = ssub.s32 4096, 4096
          %134 = vsyncadd [#allocation7], %s133
          %s135 = sshll.u32 [#allocation6], 4
          %s136 = int_to_ptr.vmem [resolvable:$true] %s135
          %141 = dma.hbm_to_vmem [thread:$0]  %s2, 4096, %s136, [#allocation7], 128, 128, 8
        $region20: #{tpu_custom_call.1} parent=11 // pred_fallthru
          _
      $region12: #{tpu_custom_call.1} parent=5 // pred_fallthru
        _
      %p142 = scmp.lt.s32.totalorder %s17, 3
      // Predicated region
      $region21: #{tpu_custom_call.1} parent=5 // pred_check
        %p143 = pneg %p142
      $region22: #{tpu_custom_call.1} parent=5 // pred_check_branch
        %145 = sbr.rel (%p143) target = $region24
      $region23: #{tpu_custom_call.1} parent=5 // pred_region
        // Predicated region
        $region25: #{tpu_custom_call.1} parent=23 // pred_check
          %p146 = pneg %p58
        $region26: #{tpu_custom_call.1} parent=23 // pred_check_branch
          %148 = sbr.rel (%p146) target = $region28
        $region27: #{tpu_custom_call.1} parent=23 // pred_region
          %s149 = sand.u32 %s48, 1
          %s150 = scalar_lea.sflag [#allocation4], %s149
          %s151 = sand.u32 %s48, 1
          %s152 = smul.addr %s151, 32
          %s153 = scalar_lea.vmem [#allocation3], %s152
          %s154 = smul.u32 2, %s17
          %s155 = ssub.s32 5, %s154
          %p156 = scmp.lt.s32.totalorder %s155, 2
          %s157 = scalar_select %p156, %s155, 2
          %s158 = smul.u32 128, %s157
          %s159 = smul.u32 %s158, 2
          %s161 = ssub.s32 512, %s159
          %162 = vsyncadd %s150, %s161
          %p163 = scmp.ne.s32.totalorder 0, %s159
          %s164 = smul.addr %s154, 2
          %s165 = smul.addr %s164, 128
          %s166 = scalar_lea.hbm %s1, %s165
          %s167 = smul.u32 16, %s157
          %s168 = sshll.u32 %s153, 4
          %s169 = int_to_ptr.vmem [resolvable:$true] %s168
          %s170 = sshll.u32 %s167, 4
          %174 = dma.hbm_to_vmem [thread:$0]  (%p163), %s166, %s170, %s169, %s150, 256, 256, 16
        $region28: #{tpu_custom_call.1} parent=23 // pred_fallthru
          _
      $region24: #{tpu_custom_call.1} parent=5 // pred_fallthru
        _
      %p175 = scmp.le.s32.totalorder 1, %s17
      %p176 = scmp.lt.s32.totalorder %s17, 4
      %p177 = pnand %p175, %p176
      %p178 = pneg %p177
      // Predicated region
      $region29: #{tpu_custom_call.1} parent=5 // pred_check
        _
      $region30: #{tpu_custom_call.1} parent=5 // pred_check_branch
        %180 = sbr.rel (%p177) target = $region32
      $region31: #{tpu_custom_call.1} parent=5 // pred_region
        %s181 = ssub.s32 %s17, 1
        %s182 = sand.u32 %s51, 1
        %s183 = scalar_lea.sflag [#allocation4], %s182
        %s184 = sand.u32 %s51, 1
        %s185 = smul.addr %s184, 32
        %s186 = scalar_lea.vmem [#allocation3], %s185
        // Predicated region
        $region33: #{tpu_custom_call.1} parent=31 // pred_check
          %p187 = pneg %p64
        $region34: #{tpu_custom_call.1} parent=31 // pred_check_branch
          %189 = sbr.rel (%p187) target = $region36
        $region35: #{tpu_custom_call.1} parent=31 // pred_region
          %190 = dma.done %s183, 512
        $region36: #{tpu_custom_call.1} parent=31 // pred_fallthru
          _
        // Predicated region
        $region37: #{tpu_custom_call.1} parent=31 // pred_check
          %p191 = pneg %p85
        $region38: #{tpu_custom_call.1} parent=31 // pred_check_branch
          %193 = sbr.rel (%p191) target = $region40
        $region39: #{tpu_custom_call.1} parent=31 // pred_region
          %194 = dma.done [#allocation7], 4096
        $region40: #{tpu_custom_call.1} parent=31 // pred_fallthru
          _
        %p195 = pneg %p38
        %p196 = pneg %p35
        %s197 = sand.u32 %s51, 1
        %s198 = scalar_lea.sflag [#allocation4], %s197
        %s199 = sand.u32 %s51, 1
        %s200 = smul.addr %s199, 32
        %s201 = scalar_lea.vmem [#allocation3], %s200
        %p202 = pneg %p64
        %p203 = pneg %p61
        %p204 = pneg %p85
        %p205 = pneg %p82
        %p206 = pneg %p111
        %p207 = pneg %p108
        %s208 = sand.u32 %s98, 1
        %s209 = scalar_lea.sflag [#allocation5], %s208
        %s210 = sand.u32 %s98, 1
        %s211 = smul.addr %s210, 16
        %s212 = scalar_lea.vmem [#allocation8], %s211
        %s213 = smul.u32 2, %s22
        %s214 = ssub.s32 5, %s213
        %p215 = scmp.lt.s32.totalorder %s214, 2
        %s216 = scalar_select %p215, %s214, 2
        %s217 = smul.u32 128, %s216
        %s218 = smul.u32 %s217, 2
        %s219 = smul.u32 2, %s22
        %s220 = ssub.s32 5, %s219
        %p221 = scmp.lt.s32.totalorder %s220, 2
        %s222 = scalar_select %p221, %s220, 2
        %s223 = smul.u32 128, %s222
        %v224 = vld [vmem:[%s186] sm:$0xff]
        %v225 = vld [vmem:[%s186 + $0x8] sm:$0xff]
        %v226 = vld [vmem:[%s186 + $0x10] sm:$0xff]
        %v227 = vld [vmem:[%s186 + $0x18] sm:$0xff]
        %v228 = vld [vmem:[#allocation6] sm:$0xff]
        %v229 = vld [vmem:[#allocation6 + $0x8] sm:$0xff]
        %v230 = vld [vmem:[#allocation6 + $0x10] sm:$0xff]
        %v231 = vld [vmem:[#allocation6 + $0x18] sm:$0xff]
        %v232 = vld [vmem:[#allocation6 + $0x20] sm:$0xff]
        %v233 = vld [vmem:[#allocation6 + $0x28] sm:$0xff]
        %v234 = vld [vmem:[#allocation6 + $0x30] sm:$0xff]
        %v235 = vld [vmem:[#allocation6 + $0x38] sm:$0xff]
        %v236 = vld [vmem:[#allocation6 + $0x40] sm:$0xff]
        %v237 = vld [vmem:[#allocation6 + $0x48] sm:$0xff]
        %v238 = vld [vmem:[#allocation6 + $0x50] sm:$0xff]
        %v239 = vld [vmem:[#allocation6 + $0x58] sm:$0xff]
        %v240 = vld [vmem:[#allocation6 + $0x60] sm:$0xff]
        %v241 = vld [vmem:[#allocation6 + $0x68] sm:$0xff]
        %v242 = vld [vmem:[#allocation6 + $0x70] sm:$0xff]
        %v243 = vld [vmem:[#allocation6 + $0x78] sm:$0xff]
        %v244 = vld [vmem:[#allocation6 + $0x80] sm:$0xff]
        %v245 = vld [vmem:[#allocation6 + $0x88] sm:$0xff]
        %v246 = vld [vmem:[#allocation6 + $0x90] sm:$0xff]
        %v247 = vld [vmem:[#allocation6 + $0x98] sm:$0xff]
        %v248 = vld [vmem:[#allocation6 + $0xa0] sm:$0xff]
        %v249 = vld [vmem:[#allocation6 + $0xa8] sm:$0xff]
        %v250 = vld [vmem:[#allocation6 + $0xb0] sm:$0xff]
        %v251 = vld [vmem:[#allocation6 + $0xb8] sm:$0xff]
        %v252 = vld [vmem:[#allocation6 + $0xc0] sm:$0xff]
        %v253 = vld [vmem:[#allocation6 + $0xc8] sm:$0xff]
        %v254 = vld [vmem:[#allocation6 + $0xd0] sm:$0xff]
        %v255 = vld [vmem:[#allocation6 + $0xd8] sm:$0xff]
        %v256 = vld [vmem:[#allocation6 + $0xe0] sm:$0xff]
        %v257 = vld [vmem:[#allocation6 + $0xe8] sm:$0xff]
        %v258 = vld [vmem:[#allocation6 + $0xf0] sm:$0xff]
        %v259 = vld [vmem:[#allocation6 + $0xf8] sm:$0xff]
        %260 = vmatprep.subr.mxu0 0.0
        %v261 = vand.u32 %v243, 4294901760
        %262 = vmatpush1.msra.mxu0 %v261
        %263 = vmatprep.subr.mxu0 0.0
        %v264 = vand.u32 %v242, 4294901760
        %265 = vmatpush1.msra.mxu0 %v264
        %266 = vmatprep.subr.mxu0 0.0
        %v267 = vand.u32 %v241, 4294901760
        %268 = vmatpush1.msra.mxu0 %v267
        %269 = vmatprep.subr.mxu0 0.0
        %v270 = vand.u32 %v240, 4294901760
        %271 = vmatpush1.msra.mxu0 %v270
        %272 = vmatprep.subr.mxu0 0.0
        %v273 = vand.u32 %v239, 4294901760
        %274 = vmatpush1.msra.mxu0 %v273
        %275 = vmatprep.subr.mxu0 0.0
        %v276 = vand.u32 %v238, 4294901760
        %277 = vmatpush1.msra.mxu0 %v276
        %278 = vmatprep.subr.mxu0 0.0
        %v279 = vand.u32 %v237, 4294901760
        %280 = vmatpush1.msra.mxu0 %v279
        %281 = vmatprep.subr.mxu0 0.0
        %v282 = vand.u32 %v236, 4294901760
        %283 = vmatpush1.msra.mxu0 %v282
        %284 = vmatprep.subr.mxu0 0.0
        %v285 = vand.u32 %v235, 4294901760
        %286 = vmatpush1.msra.mxu0 %v285
        %287 = vmatprep.subr.mxu0 0.0
        %v288 = vand.u32 %v234, 4294901760
        %289 = vmatpush1.msra.mxu0 %v288
        %290 = vmatprep.subr.mxu0 0.0
        %v291 = vand.u32 %v233, 4294901760
        %292 = vmatpush1.msra.mxu0 %v291
        %293 = vmatprep.subr.mxu0 0.0
        %v294 = vand.u32 %v232, 4294901760
        %295 = vmatpush1.msra.mxu0 %v294
        %296 = vmatprep.subr.mxu0 0.0
        %v297 = vand.u32 %v231, 4294901760
        %298 = vmatpush1.msra.mxu0 %v297
        %299 = vmatprep.subr.mxu0 0.0
        %v300 = vand.u32 %v230, 4294901760
        %301 = vmatpush1.msra.mxu0 %v300
        %302 = vmatprep.subr.mxu0 0.0
        %v303 = vand.u32 %v229, 4294901760
        %304 = vmatpush1.msra.mxu0 %v303
        %305 = vmatprep.subr.mxu0 0.0
        %v306 = vand.u32 %v228, 4294901760
        %307 = vmatpush1.msra.mxu0 %v306
        %308 = vmatprep.subr.mxu0 0.0
        %v309 = vand.u32 %v259, 4294901760
        %310 = vmatpush2.msra.mxu0 %v309
        %311 = vmatprep.subr.mxu0 0.0
        %v312 = vand.u32 %v258, 4294901760
        %313 = vmatpush2.msra.mxu0 %v312
        %314 = vmatprep.subr.mxu0 0.0
        %v315 = vand.u32 %v257, 4294901760
        %316 = vmatpush2.msra.mxu0 %v315
        %317 = vmatprep.subr.mxu0 0.0
        %v318 = vand.u32 %v256, 4294901760
        %319 = vmatpush2.msra.mxu0 %v318
        %320 = vmatprep.subr.mxu0 0.0
        %v321 = vand.u32 %v255, 4294901760
        %322 = vmatpush2.msra.mxu0 %v321
        %323 = vmatprep.subr.mxu0 0.0
        %v324 = vand.u32 %v254, 4294901760
        %325 = vmatpush2.msra.mxu0 %v324
        %326 = vmatprep.subr.mxu0 0.0
        %v327 = vand.u32 %v253, 4294901760
        %328 = vmatpush2.msra.mxu0 %v327
        %329 = vmatprep.subr.mxu0 0.0
        %v330 = vand.u32 %v252, 4294901760
        %331 = vmatpush2.msra.mxu0 %v330
        %332 = vmatprep.subr.mxu0 0.0
        %v333 = vand.u32 %v251, 4294901760
        %334 = vmatpush2.msra.mxu0 %v333
        %335 = vmatprep.subr.mxu0 0.0
        %v336 = vand.u32 %v250, 4294901760
        %337 = vmatpush2.msra.mxu0 %v336
        %338 = vmatprep.subr.mxu0 0.0
        %v339 = vand.u32 %v249, 4294901760
        %340 = vmatpush2.msra.mxu0 %v339
        %341 = vmatprep.subr.mxu0 0.0
        %v342 = vand.u32 %v248, 4294901760
        %343 = vmatpush2.msra.mxu0 %v342
        %344 = vmatprep.subr.mxu0 0.0
        %v345 = vand.u32 %v247, 4294901760
        %346 = vmatpush2.msra.mxu0 %v345
        %347 = vmatprep.subr.mxu0 0.0
        %v348 = vand.u32 %v246, 4294901760
        %349 = vmatpush2.msra.mxu0 %v348
        %350 = vmatprep.subr.mxu0 0.0
        %v351 = vand.u32 %v245, 4294901760
        %352 = vmatpush2.msra.mxu0 %v351
        %353 = vmatprep.subr.mxu0 0.0
        %v354 = vand.u32 %v244, 4294901760
        %355 = vmatpush2.msra.mxu0 %v354
        %v356 = vand.u32 %v225, 4294901760
        %v357 = vsub.f32 %v225, %v356
        %v358 = vand.u32 %v357, 4294901760
        %v359 = vsub.f32 %v357, %v358
        %v360 = vand.u32 %v359, 4294901760
        %361 = vmatprep.mubr.f32.mxu0 %v360
        %v362 = vand.u32 %v224, 4294901760
        %v363 = vsub.f32 %v224, %v362
        %v364 = vand.u32 %v363, 4294901760
        %v365 = vsub.f32 %v363, %v364
        %v366 = vand.u32 %v365, 4294901760
        %367 = vmatmul.mubr.f32.gmra.mxu0 %v366
        %v368 = vpop.f32.mrf.mxu0
        %v369 = vadd.f32 0.0, %v368
        %v370 = vpop.f32.mrf.mxu0
        %v371 = vand.u32 %v227, 4294901760
        %v372 = vsub.f32 %v227, %v371
        %v373 = vand.u32 %v372, 4294901760
        %v374 = vsub.f32 %v372, %v373
        %v375 = vand.u32 %v374, 4294901760
        %376 = vmatprep.mubr.f32.mxu0 %v375
        %v377 = vand.u32 %v226, 4294901760
        %v378 = vsub.f32 %v226, %v377
        %v379 = vand.u32 %v378, 4294901760
        %v380 = vsub.f32 %v378, %v379
        %v381 = vand.u32 %v380, 4294901760
        %382 = vmatmul.mubr.f32.gmra.mxu0 %v381
        %v383 = vpop.f32.mrf.mxu0
        %v384 = vadd.f32 0.0, %v383
        %v385 = vpop.f32.mrf.mxu0
        %386 = vdwg.mxu0
        %387 = vmatprep.subr.mxu0 0.0
        %v388 = vand.u32 %v243, 4294901760
        %v389 = vsub.f32 %v243, %v388
        %v390 = vand.u32 %v389, 4294901760
        %v391 = vsub.f32 %v389, %v390
        %v392 = vand.u32 %v391, 4294901760
        %393 = vmatpush1.msra.mxu0 %v392
        %394 = vmatprep.subr.mxu0 0.0
        %v395 = vand.u32 %v242, 4294901760
        %v396 = vsub.f32 %v242, %v395
        %v397 = vand.u32 %v396, 4294901760
        %v398 = vsub.f32 %v396, %v397
        %v399 = vand.u32 %v398, 4294901760
        %400 = vmatpush1.msra.mxu0 %v399
        %401 = vmatprep.subr.mxu0 0.0
        %v402 = vand.u32 %v241, 4294901760
        %v403 = vsub.f32 %v241, %v402
        %v404 = vand.u32 %v403, 4294901760
        %v405 = vsub.f32 %v403, %v404
        %v406 = vand.u32 %v405, 4294901760
        %407 = vmatpush1.msra.mxu0 %v406
        %408 = vmatprep.subr.mxu0 0.0
        %v409 = vand.u32 %v240, 4294901760
        %v410 = vsub.f32 %v240, %v409
        %v411 = vand.u32 %v410, 4294901760
        %v412 = vsub.f32 %v410, %v411
        %v413 = vand.u32 %v412, 4294901760
        %414 = vmatpush1.msra.mxu0 %v413
        %415 = vmatprep.subr.mxu0 0.0
        %v416 = vand.u32 %v239, 4294901760
        %v417 = vsub.f32 %v239, %v416
        %v418 = vand.u32 %v417, 4294901760
        %v419 = vsub.f32 %v417, %v418
        %v420 = vand.u32 %v419, 4294901760
        %421 = vmatpush1.msra.mxu0 %v420
        %422 = vmatprep.subr.mxu0 0.0
        %v423 = vand.u32 %v238, 4294901760
        %v424 = vsub.f32 %v238, %v423
        %v425 = vand.u32 %v424, 4294901760
        %v426 = vsub.f32 %v424, %v425
        %v427 = vand.u32 %v426, 4294901760
        %428 = vmatpush1.msra.mxu0 %v427
        %429 = vmatprep.subr.mxu0 0.0
        %v430 = vand.u32 %v237, 4294901760
        %v431 = vsub.f32 %v237, %v430
        %v432 = vand.u32 %v431, 4294901760
        %v433 = vsub.f32 %v431, %v432
        %v434 = vand.u32 %v433, 4294901760
        %435 = vmatpush1.msra.mxu0 %v434
        %436 = vmatprep.subr.mxu0 0.0
        %v437 = vand.u32 %v236, 4294901760
        %v438 = vsub.f32 %v236, %v437
        %v439 = vand.u32 %v438, 4294901760
        %v440 = vsub.f32 %v438, %v439
        %v441 = vand.u32 %v440, 4294901760
        %442 = vmatpush1.msra.mxu0 %v441
        %443 = vmatprep.subr.mxu0 0.0
        %v444 = vand.u32 %v235, 4294901760
        %v445 = vsub.f32 %v235, %v444
        %v446 = vand.u32 %v445, 4294901760
        %v447 = vsub.f32 %v445, %v446
        %v448 = vand.u32 %v447, 4294901760
        %449 = vmatpush1.msra.mxu0 %v448
        %450 = vmatprep.subr.mxu0 0.0
        %v451 = vand.u32 %v234, 4294901760
        %v452 = vsub.f32 %v234, %v451
        %v453 = vand.u32 %v452, 4294901760
        %v454 = vsub.f32 %v452, %v453
        %v455 = vand.u32 %v454, 4294901760
        %456 = vmatpush1.msra.mxu0 %v455
        %457 = vmatprep.subr.mxu0 0.0
        %v458 = vand.u32 %v233, 4294901760
        %v459 = vsub.f32 %v233, %v458
        %v460 = vand.u32 %v459, 4294901760
        %v461 = vsub.f32 %v459, %v460
        %v462 = vand.u32 %v461, 4294901760
        %463 = vmatpush1.msra.mxu0 %v462
        %464 = vmatprep.subr.mxu0 0.0
        %v465 = vand.u32 %v232, 4294901760
        %v466 = vsub.f32 %v232, %v465
        %v467 = vand.u32 %v466, 4294901760
        %v468 = vsub.f32 %v466, %v467
        %v469 = vand.u32 %v468, 4294901760
        %470 = vmatpush1.msra.mxu0 %v469
        %471 = vmatprep.subr.mxu0 0.0
        %v472 = vand.u32 %v231, 4294901760
        %v473 = vsub.f32 %v231, %v472
        %v474 = vand.u32 %v473, 4294901760
        %v475 = vsub.f32 %v473, %v474
        %v476 = vand.u32 %v475, 4294901760
        %477 = vmatpush1.msra.mxu0 %v476
        %478 = vmatprep.subr.mxu0 0.0
        %v479 = vand.u32 %v230, 4294901760
        %v480 = vsub.f32 %v230, %v479
        %v481 = vand.u32 %v480, 4294901760
        %v482 = vsub.f32 %v480, %v481
        %v483 = vand.u32 %v482, 4294901760
        %484 = vmatpush1.msra.mxu0 %v483
        %485 = vmatprep.subr.mxu0 0.0
        %v486 = vand.u32 %v229, 4294901760
        %v487 = vsub.f32 %v229, %v486
        %v488 = vand.u32 %v487, 4294901760
        %v489 = vsub.f32 %v487, %v488
        %v490 = vand.u32 %v489, 4294901760
        %491 = vmatpush1.msra.mxu0 %v490
        %492 = vmatprep.subr.mxu0 0.0
        %v493 = vand.u32 %v228, 4294901760
        %v494 = vsub.f32 %v228, %v493
        %v495 = vand.u32 %v494, 4294901760
        %v496 = vsub.f32 %v494, %v495
        %v497 = vand.u32 %v496, 4294901760
        %498 = vmatpush1.msra.mxu0 %v497
        %499 = vmatprep.subr.mxu0 0.0
        %v500 = vand.u32 %v259, 4294901760
        %v501 = vsub.f32 %v259, %v500
        %v502 = vand.u32 %v501, 4294901760
        %v503 = vsub.f32 %v501, %v502
        %v504 = vand.u32 %v503, 4294901760
        %505 = vmatpush2.msra.mxu0 %v504
        %506 = vmatprep.subr.mxu0 0.0
        %v507 = vand.u32 %v258, 4294901760
        %v508 = vsub.f32 %v258, %v507
        %v509 = vand.u32 %v508, 4294901760
        %v510 = vsub.f32 %v508, %v509
        %v511 = vand.u32 %v510, 4294901760
        %512 = vmatpush2.msra.mxu0 %v511
        %513 = vmatprep.subr.mxu0 0.0
        %v514 = vand.u32 %v257, 4294901760
        %v515 = vsub.f32 %v257, %v514
        %v516 = vand.u32 %v515, 4294901760
        %v517 = vsub.f32 %v515, %v516
        %v518 = vand.u32 %v517, 4294901760
        %519 = vmatpush2.msra.mxu0 %v518
        %520 = vmatprep.subr.mxu0 0.0
        %v521 = vand.u32 %v256, 4294901760
        %v522 = vsub.f32 %v256, %v521
        %v523 = vand.u32 %v522, 4294901760
        %v524 = vsub.f32 %v522, %v523
        %v525 = vand.u32 %v524, 4294901760
        %526 = vmatpush2.msra.mxu0 %v525
        %527 = vmatprep.subr.mxu0 0.0
        %v528 = vand.u32 %v255, 4294901760
        %v529 = vsub.f32 %v255, %v528
        %v530 = vand.u32 %v529, 4294901760
        %v531 = vsub.f32 %v529, %v530
        %v532 = vand.u32 %v531, 4294901760
        %533 = vmatpush2.msra.mxu0 %v532
        %534 = vmatprep.subr.mxu0 0.0
        %v535 = vand.u32 %v254, 4294901760
        %v536 = vsub.f32 %v254, %v535
        %v537 = vand.u32 %v536, 4294901760
        %v538 = vsub.f32 %v536, %v537
        %v539 = vand.u32 %v538, 4294901760
        %540 = vmatpush2.msra.mxu0 %v539
        %541 = vmatprep.subr.mxu0 0.0
        %v542 = vand.u32 %v253, 4294901760
        %v543 = vsub.f32 %v253, %v542
        %v544 = vand.u32 %v543, 4294901760
        %v545 = vsub.f32 %v543, %v544
        %v546 = vand.u32 %v545, 4294901760
        %547 = vmatpush2.msra.mxu0 %v546
        %548 = vmatprep.subr.mxu0 0.0
        %v549 = vand.u32 %v252, 4294901760
        %v550 = vsub.f32 %v252, %v549
        %v551 = vand.u32 %v550, 4294901760
        %v552 = vsub.f32 %v550, %v551
        %v553 = vand.u32 %v552, 4294901760
        %554 = vmatpush2.msra.mxu0 %v553
        %555 = vmatprep.subr.mxu0 0.0
        %v556 = vand.u32 %v251, 4294901760
        %v557 = vsub.f32 %v251, %v556
        %v558 = vand.u32 %v557, 4294901760
        %v559 = vsub.f32 %v557, %v558
        %v560 = vand.u32 %v559, 4294901760
        %561 = vmatpush2.msra.mxu0 %v560
        %562 = vmatprep.subr.mxu0 0.0
        %v563 = vand.u32 %v250, 4294901760
        %v564 = vsub.f32 %v250, %v563
        %v565 = vand.u32 %v564, 4294901760
        %v566 = vsub.f32 %v564, %v565
        %v567 = vand.u32 %v566, 4294901760
        %568 = vmatpush2.msra.mxu0 %v567
        %569 = vmatprep.subr.mxu0 0.0
        %v570 = vand.u32 %v249, 4294901760
        %v571 = vsub.f32 %v249, %v570
        %v572 = vand.u32 %v571, 4294901760
        %v573 = vsub.f32 %v571, %v572
        %v574 = vand.u32 %v573, 4294901760
        %575 = vmatpush2.msra.mxu0 %v574
        %576 = vmatprep.subr.mxu0 0.0
        %v577 = vand.u32 %v248, 4294901760
        %v578 = vsub.f32 %v248, %v577
        %v579 = vand.u32 %v578, 4294901760
        %v580 = vsub.f32 %v578, %v579
        %v581 = vand.u32 %v580, 4294901760
        %582 = vmatpush2.msra.mxu0 %v581
        %583 = vmatprep.subr.mxu0 0.0
        %v584 = vand.u32 %v247, 4294901760
        %v585 = vsub.f32 %v247, %v584
        %v586 = vand.u32 %v585, 4294901760
        %v587 = vsub.f32 %v585, %v586
        %v588 = vand.u32 %v587, 4294901760
        %589 = vmatpush2.msra.mxu0 %v588
        %590 = vmatprep.subr.mxu0 0.0
        %v591 = vand.u32 %v246, 4294901760
        %v592 = vsub.f32 %v246, %v591
        %v593 = vand.u32 %v592, 4294901760
        %v594 = vsub.f32 %v592, %v593
        %v595 = vand.u32 %v594, 4294901760
        %596 = vmatpush2.msra.mxu0 %v595
        %597 = vmatprep.subr.mxu0 0.0
        %v598 = vand.u32 %v245, 4294901760
        %v599 = vsub.f32 %v245, %v598
        %v600 = vand.u32 %v599, 4294901760
        %v601 = vsub.f32 %v599, %v600
        %v602 = vand.u32 %v601, 4294901760
        %603 = vmatpush2.msra.mxu0 %v602
        %604 = vmatprep.subr.mxu0 0.0
        %v605 = vand.u32 %v244, 4294901760
        %v606 = vsub.f32 %v244, %v605
        %v607 = vand.u32 %v606, 4294901760
        %v608 = vsub.f32 %v606, %v607
        %v609 = vand.u32 %v608, 4294901760
        %610 = vmatpush2.msra.mxu0 %v609
        %v611 = vand.u32 %v225, 4294901760
        %612 = vmatprep.mubr.f32.mxu0 %v611
        %v613 = vand.u32 %v224, 4294901760
        %614 = vmatmul.mubr.f32.gmra.mxu0 %v613
        %v615 = vpop.f32.mrf.mxu0
        %v616 = vadd.f32 %v369, %v615
        %v617 = vpop.f32.mrf.mxu0
        %v618 = vand.u32 %v227, 4294901760
        %619 = vmatprep.mubr.f32.mxu0 %v618
        %v620 = vand.u32 %v226, 4294901760
        %621 = vmatmul.mubr.f32.gmra.mxu0 %v620
        %v622 = vpop.f32.mrf.mxu0
        %v623 = vadd.f32 %v384, %v622
        %v624 = vpop.f32.mrf.mxu0
        %625 = vdwg.mxu0
        %626 = vmatprep.subr.mxu0 0.0
        %v627 = vand.u32 %v243, 4294901760
        %v628 = vsub.f32 %v243, %v627
        %629 = vmatpush1.msra.mxu0 %v628
        %630 = vmatprep.subr.mxu0 0.0
        %v631 = vand.u32 %v242, 4294901760
        %v632 = vsub.f32 %v242, %v631
        %633 = vmatpush1.msra.mxu0 %v632
        %634 = vmatprep.subr.mxu0 0.0
        %v635 = vand.u32 %v241, 4294901760
        %v636 = vsub.f32 %v241, %v635
        %637 = vmatpush1.msra.mxu0 %v636
        %638 = vmatprep.subr.mxu0 0.0
        %v639 = vand.u32 %v240, 4294901760
        %v640 = vsub.f32 %v240, %v639
        %641 = vmatpush1.msra.mxu0 %v640
        %642 = vmatprep.subr.mxu0 0.0
        %v643 = vand.u32 %v239, 4294901760
        %v644 = vsub.f32 %v239, %v643
        %645 = vmatpush1.msra.mxu0 %v644
        %646 = vmatprep.subr.mxu0 0.0
        %v647 = vand.u32 %v238, 4294901760
        %v648 = vsub.f32 %v238, %v647
        %649 = vmatpush1.msra.mxu0 %v648
        %650 = vmatprep.subr.mxu0 0.0
        %v651 = vand.u32 %v237, 4294901760
        %v652 = vsub.f32 %v237, %v651
        %653 = vmatpush1.msra.mxu0 %v652
        %654 = vmatprep.subr.mxu0 0.0
        %v655 = vand.u32 %v236, 4294901760
        %v656 = vsub.f32 %v236, %v655
        %657 = vmatpush1.msra.mxu0 %v656
        %658 = vmatprep.subr.mxu0 0.0
        %v659 = vand.u32 %v235, 4294901760
        %v660 = vsub.f32 %v235, %v659
        %661 = vmatpush1.msra.mxu0 %v660
        %662 = vmatprep.subr.mxu0 0.0
        %v663 = vand.u32 %v234, 4294901760
        %v664 = vsub.f32 %v234, %v663
        %665 = vmatpush1.msra.mxu0 %v664
        %666 = vmatprep.subr.mxu0 0.0
        %v667 = vand.u32 %v233, 4294901760
        %v668 = vsub.f32 %v233, %v667
        %669 = vmatpush1.msra.mxu0 %v668
        %670 = vmatprep.subr.mxu0 0.0
        %v671 = vand.u32 %v232, 4294901760
        %v672 = vsub.f32 %v232, %v671
        %673 = vmatpush1.msra.mxu0 %v672
        %674 = vmatprep.subr.mxu0 0.0
        %v675 = vand.u32 %v231, 4294901760
        %v676 = vsub.f32 %v231, %v675
        %677 = vmatpush1.msra.mxu0 %v676
        %678 = vmatprep.subr.mxu0 0.0
        %v679 = vand.u32 %v230, 4294901760
        %v680 = vsub.f32 %v230, %v679
        %681 = vmatpush1.msra.mxu0 %v680
        %682 = vmatprep.subr.mxu0 0.0
        %v683 = vand.u32 %v229, 4294901760
        %v684 = vsub.f32 %v229, %v683
        %685 = vmatpush1.msra.mxu0 %v684
        %686 = vmatprep.subr.mxu0 0.0
        %v687 = vand.u32 %v228, 4294901760
        %v688 = vsub.f32 %v228, %v687
        %689 = vmatpush1.msra.mxu0 %v688
        %690 = vmatprep.subr.mxu0 0.0
        %v691 = vand.u32 %v259, 4294901760
        %v692 = vsub.f32 %v259, %v691
        %693 = vmatpush2.msra.mxu0 %v692
        %694 = vmatprep.subr.mxu0 0.0
        %v695 = vand.u32 %v258, 4294901760
        %v696 = vsub.f32 %v258, %v695
        %697 = vmatpush2.msra.mxu0 %v696
        %698 = vmatprep.subr.mxu0 0.0
        %v699 = vand.u32 %v257, 4294901760
        %v700 = vsub.f32 %v257, %v699
        %701 = vmatpush2.msra.mxu0 %v700
        %702 = vmatprep.subr.mxu0 0.0
        %v703 = vand.u32 %v256, 4294901760
        %v704 = vsub.f32 %v256, %v703
        %705 = vmatpush2.msra.mxu0 %v704
        %706 = vmatprep.subr.mxu0 0.0
        %v707 = vand.u32 %v255, 4294901760
        %v708 = vsub.f32 %v255, %v707
        %709 = vmatpush2.msra.mxu0 %v708
        %710 = vmatprep.subr.mxu0 0.0
        %v711 = vand.u32 %v254, 4294901760
        %v712 = vsub.f32 %v254, %v711
        %713 = vmatpush2.msra.mxu0 %v712
        %714 = vmatprep.subr.mxu0 0.0
        %v715 = vand.u32 %v253, 4294901760
        %v716 = vsub.f32 %v253, %v715
        %717 = vmatpush2.msra.mxu0 %v716
        %718 = vmatprep.subr.mxu0 0.0
        %v719 = vand.u32 %v252, 4294901760
        %v720 = vsub.f32 %v252, %v719
        %721 = vmatpush2.msra.mxu0 %v720
        %722 = vmatprep.subr.mxu0 0.0
        %v723 = vand.u32 %v251, 4294901760
        %v724 = vsub.f32 %v251, %v723
        %725 = vmatpush2.msra.mxu0 %v724
        %726 = vmatprep.subr.mxu0 0.0
        %v727 = vand.u32 %v250, 4294901760
        %v728 = vsub.f32 %v250, %v727
        %729 = vmatpush2.msra.mxu0 %v728
        %730 = vmatprep.subr.mxu0 0.0
        %v731 = vand.u32 %v249, 4294901760
        %v732 = vsub.f32 %v249, %v731
        %733 = vmatpush2.msra.mxu0 %v732
        %734 = vmatprep.subr.mxu0 0.0
        %v735 = vand.u32 %v248, 4294901760
        %v736 = vsub.f32 %v248, %v735
        %737 = vmatpush2.msra.mxu0 %v736
        %738 = vmatprep.subr.mxu0 0.0
        %v739 = vand.u32 %v247, 4294901760
        %v740 = vsub.f32 %v247, %v739
        %741 = vmatpush2.msra.mxu0 %v740
        %742 = vmatprep.subr.mxu0 0.0
        %v743 = vand.u32 %v246, 4294901760
        %v744 = vsub.f32 %v246, %v743
        %745 = vmatpush2.msra.mxu0 %v744
        %746 = vmatprep.subr.mxu0 0.0
        %v747 = vand.u32 %v245, 4294901760
        %v748 = vsub.f32 %v245, %v747
        %749 = vmatpush2.msra.mxu0 %v748
        %750 = vmatprep.subr.mxu0 0.0
        %v751 = vand.u32 %v244, 4294901760
        %v752 = vsub.f32 %v244, %v751
        %753 = vmatpush2.msra.mxu0 %v752
        %v754 = vand.u32 %v225, 4294901760
        %v755 = vsub.f32 %v225, %v754
        %756 = vmatprep.mubr.f32.mxu0 %v755
        %v757 = vand.u32 %v224, 4294901760
        %v758 = vsub.f32 %v224, %v757
        %759 = vmatmul.mubr.f32.gmra.mxu0 %v758
        %v760 = vpop.f32.mrf.mxu0
        %v761 = vadd.f32 %v616, %v760
        %v762 = vpop.f32.mrf.mxu0
        %v763 = vand.u32 %v227, 4294901760
        %v764 = vsub.f32 %v227, %v763
        %765 = vmatprep.mubr.f32.mxu0 %v764
        %v766 = vand.u32 %v226, 4294901760
        %v767 = vsub.f32 %v226, %v766
        %768 = vmatmul.mubr.f32.gmra.mxu0 %v767
        %v769 = vpop.f32.mrf.mxu0
        %v770 = vadd.f32 %v623, %v769
        %v771 = vpop.f32.mrf.mxu0
        %772 = vdwg.mxu0
        %773 = vmatprep.subr.mxu0 0.0
        %v774 = vand.u32 %v243, 4294901760
        %775 = vmatpush1.msra.mxu0 %v774
        %776 = vmatprep.subr.mxu0 0.0
        %v777 = vand.u32 %v242, 4294901760
        %778 = vmatpush1.msra.mxu0 %v777
        %779 = vmatprep.subr.mxu0 0.0
        %v780 = vand.u32 %v241, 4294901760
        %781 = vmatpush1.msra.mxu0 %v780
        %782 = vmatprep.subr.mxu0 0.0
        %v783 = vand.u32 %v240, 4294901760
        %784 = vmatpush1.msra.mxu0 %v783
        %785 = vmatprep.subr.mxu0 0.0
        %v786 = vand.u32 %v239, 4294901760
        %787 = vmatpush1.msra.mxu0 %v786
        %788 = vmatprep.subr.mxu0 0.0
        %v789 = vand.u32 %v238, 4294901760
        %790 = vmatpush1.msra.mxu0 %v789
        %791 = vmatprep.subr.mxu0 0.0
        %v792 = vand.u32 %v237, 4294901760
        %793 = vmatpush1.msra.mxu0 %v792
        %794 = vmatprep.subr.mxu0 0.0
        %v795 = vand.u32 %v236, 4294901760
        %796 = vmatpush1.msra.mxu0 %v795
        %797 = vmatprep.subr.mxu0 0.0
        %v798 = vand.u32 %v235, 4294901760
        %799 = vmatpush1.msra.mxu0 %v798
        %800 = vmatprep.subr.mxu0 0.0
        %v801 = vand.u32 %v234, 4294901760
        %802 = vmatpush1.msra.mxu0 %v801
        %803 = vmatprep.subr.mxu0 0.0
        %v804 = vand.u32 %v233, 4294901760
        %805 = vmatpush1.msra.mxu0 %v804
        %806 = vmatprep.subr.mxu0 0.0
        %v807 = vand.u32 %v232, 4294901760
        %808 = vmatpush1.msra.mxu0 %v807
        %809 = vmatprep.subr.mxu0 0.0
        %v810 = vand.u32 %v231, 4294901760
        %811 = vmatpush1.msra.mxu0 %v810
        %812 = vmatprep.subr.mxu0 0.0
        %v813 = vand.u32 %v230, 4294901760
        %814 = vmatpush1.msra.mxu0 %v813
        %815 = vmatprep.subr.mxu0 0.0
        %v816 = vand.u32 %v229, 4294901760
        %817 = vmatpush1.msra.mxu0 %v816
        %818 = vmatprep.subr.mxu0 0.0
        %v819 = vand.u32 %v228, 4294901760
        %820 = vmatpush1.msra.mxu0 %v819
        %821 = vmatprep.subr.mxu0 0.0
        %v822 = vand.u32 %v259, 4294901760
        %823 = vmatpush2.msra.mxu0 %v822
        %824 = vmatprep.subr.mxu0 0.0
        %v825 = vand.u32 %v258, 4294901760
        %826 = vmatpush2.msra.mxu0 %v825
        %827 = vmatprep.subr.mxu0 0.0
        %v828 = vand.u32 %v257, 4294901760
        %829 = vmatpush2.msra.mxu0 %v828
        %830 = vmatprep.subr.mxu0 0.0
        %v831 = vand.u32 %v256, 4294901760
        %832 = vmatpush2.msra.mxu0 %v831
        %833 = vmatprep.subr.mxu0 0.0
        %v834 = vand.u32 %v255, 4294901760
        %835 = vmatpush2.msra.mxu0 %v834
        %836 = vmatprep.subr.mxu0 0.0
        %v837 = vand.u32 %v254, 4294901760
        %838 = vmatpush2.msra.mxu0 %v837
        %839 = vmatprep.subr.mxu0 0.0
        %v840 = vand.u32 %v253, 4294901760
        %841 = vmatpush2.msra.mxu0 %v840
        %842 = vmatprep.subr.mxu0 0.0
        %v843 = vand.u32 %v252, 4294901760
        %844 = vmatpush2.msra.mxu0 %v843
        %845 = vmatprep.subr.mxu0 0.0
        %v846 = vand.u32 %v251, 4294901760
        %847 = vmatpush2.msra.mxu0 %v846
        %848 = vmatprep.subr.mxu0 0.0
        %v849 = vand.u32 %v250, 4294901760
        %850 = vmatpush2.msra.mxu0 %v849
        %851 = vmatprep.subr.mxu0 0.0
        %v852 = vand.u32 %v249, 4294901760
        %853 = vmatpush2.msra.mxu0 %v852
        %854 = vmatprep.subr.mxu0 0.0
        %v855 = vand.u32 %v248, 4294901760
        %856 = vmatpush2.msra.mxu0 %v855
        %857 = vmatprep.subr.mxu0 0.0
        %v858 = vand.u32 %v247, 4294901760
        %859 = vmatpush2.msra.mxu0 %v858
        %860 = vmatprep.subr.mxu0 0.0
        %v861 = vand.u32 %v246, 4294901760
        %862 = vmatpush2.msra.mxu0 %v861
        %863 = vmatprep.subr.mxu0 0.0
        %v864 = vand.u32 %v245, 4294901760
        %865 = vmatpush2.msra.mxu0 %v864
        %866 = vmatprep.subr.mxu0 0.0
        %v867 = vand.u32 %v244, 4294901760
        %868 = vmatpush2.msra.mxu0 %v867
        %v869 = vand.u32 %v225, 4294901760
        %v870 = vsub.f32 %v225, %v869
        %v871 = vand.u32 %v870, 4294901760
        %872 = vmatprep.mubr.f32.mxu0 %v871
        %v873 = vand.u32 %v224, 4294901760
        %v874 = vsub.f32 %v224, %v873
        %v875 = vand.u32 %v874, 4294901760
        %876 = vmatmul.mubr.f32.gmra.mxu0 %v875
        %v877 = vpop.f32.mrf.mxu0
        %v878 = vadd.f32 %v761, %v877
        %v879 = vpop.f32.mrf.mxu0
        %v880 = vand.u32 %v227, 4294901760
        %v881 = vsub.f32 %v227, %v880
        %v882 = vand.u32 %v881, 4294901760
        %883 = vmatprep.mubr.f32.mxu0 %v882
        %v884 = vand.u32 %v226, 4294901760
        %v885 = vsub.f32 %v226, %v884
        %v886 = vand.u32 %v885, 4294901760
        %887 = vmatmul.mubr.f32.gmra.mxu0 %v886
        %v888 = vpop.f32.mrf.mxu0
        %v889 = vadd.f32 %v770, %v888
        %v890 = vpop.f32.mrf.mxu0
        %891 = vdwg.mxu0
        %892 = vmatprep.subr.mxu0 0.0
        %v893 = vand.u32 %v243, 4294901760
        %v894 = vsub.f32 %v243, %v893
        %v895 = vand.u32 %v894, 4294901760
        %896 = vmatpush1.msra.mxu0 %v895
        %897 = vmatprep.subr.mxu0 0.0
        %v898 = vand.u32 %v242, 4294901760
        %v899 = vsub.f32 %v242, %v898
        %v900 = vand.u32 %v899, 4294901760
        %901 = vmatpush1.msra.mxu0 %v900
        %902 = vmatprep.subr.mxu0 0.0
        %v903 = vand.u32 %v241, 4294901760
        %v904 = vsub.f32 %v241, %v903
        %v905 = vand.u32 %v904, 4294901760
        %906 = vmatpush1.msra.mxu0 %v905
        %907 = vmatprep.subr.mxu0 0.0
        %v908 = vand.u32 %v240, 4294901760
        %v909 = vsub.f32 %v240, %v908
        %v910 = vand.u32 %v909, 4294901760
        %911 = vmatpush1.msra.mxu0 %v910
        %912 = vmatprep.subr.mxu0 0.0
        %v913 = vand.u32 %v239, 4294901760
        %v914 = vsub.f32 %v239, %v913
        %v915 = vand.u32 %v914, 4294901760
        %916 = vmatpush1.msra.mxu0 %v915
        %917 = vmatprep.subr.mxu0 0.0
        %v918 = vand.u32 %v238, 4294901760
        %v919 = vsub.f32 %v238, %v918
        %v920 = vand.u32 %v919, 4294901760
        %921 = vmatpush1.msra.mxu0 %v920
        %922 = vmatprep.subr.mxu0 0.0
        %v923 = vand.u32 %v237, 4294901760
        %v924 = vsub.f32 %v237, %v923
        %v925 = vand.u32 %v924, 4294901760
        %926 = vmatpush1.msra.mxu0 %v925
        %927 = vmatprep.subr.mxu0 0.0
        %v928 = vand.u32 %v236, 4294901760
        %v929 = vsub.f32 %v236, %v928
        %v930 = vand.u32 %v929, 4294901760
        %931 = vmatpush1.msra.mxu0 %v930
        %932 = vmatprep.subr.mxu0 0.0
        %v933 = vand.u32 %v235, 4294901760
        %v934 = vsub.f32 %v235, %v933
        %v935 = vand.u32 %v934, 4294901760
        %936 = vmatpush1.msra.mxu0 %v935
        %937 = vmatprep.subr.mxu0 0.0
        %v938 = vand.u32 %v234, 4294901760
        %v939 = vsub.f32 %v234, %v938
        %v940 = vand.u32 %v939, 4294901760
        %941 = vmatpush1.msra.mxu0 %v940
        %942 = vmatprep.subr.mxu0 0.0
        %v943 = vand.u32 %v233, 4294901760
        %v944 = vsub.f32 %v233, %v943
        %v945 = vand.u32 %v944, 4294901760
        %946 = vmatpush1.msra.mxu0 %v945
        %947 = vmatprep.subr.mxu0 0.0
        %v948 = vand.u32 %v232, 4294901760
        %v949 = vsub.f32 %v232, %v948
        %v950 = vand.u32 %v949, 4294901760
        %951 = vmatpush1.msra.mxu0 %v950
        %952 = vmatprep.subr.mxu0 0.0
        %v953 = vand.u32 %v231, 4294901760
        %v954 = vsub.f32 %v231, %v953
        %v955 = vand.u32 %v954, 4294901760
        %956 = vmatpush1.msra.mxu0 %v955
        %957 = vmatprep.subr.mxu0 0.0
        %v958 = vand.u32 %v230, 4294901760
        %v959 = vsub.f32 %v230, %v958
        %v960 = vand.u32 %v959, 4294901760
        %961 = vmatpush1.msra.mxu0 %v960
        %962 = vmatprep.subr.mxu0 0.0
        %v963 = vand.u32 %v229, 4294901760
        %v964 = vsub.f32 %v229, %v963
        %v965 = vand.u32 %v964, 4294901760
        %966 = vmatpush1.msra.mxu0 %v965
        %967 = vmatprep.subr.mxu0 0.0
        %v968 = vand.u32 %v228, 4294901760
        %v969 = vsub.f32 %v228, %v968
        %v970 = vand.u32 %v969, 4294901760
        %971 = vmatpush1.msra.mxu0 %v970
        %972 = vmatprep.subr.mxu0 0.0
        %v973 = vand.u32 %v259, 4294901760
        %v974 = vsub.f32 %v259, %v973
        %v975 = vand.u32 %v974, 4294901760
        %976 = vmatpush2.msra.mxu0 %v975
        %977 = vmatprep.subr.mxu0 0.0
        %v978 = vand.u32 %v258, 4294901760
        %v979 = vsub.f32 %v258, %v978
        %v980 = vand.u32 %v979, 4294901760
        %981 = vmatpush2.msra.mxu0 %v980
        %982 = vmatprep.subr.mxu0 0.0
        %v983 = vand.u32 %v257, 4294901760
        %v984 = vsub.f32 %v257, %v983
        %v985 = vand.u32 %v984, 4294901760
        %986 = vmatpush2.msra.mxu0 %v985
        %987 = vmatprep.subr.mxu0 0.0
        %v988 = vand.u32 %v256, 4294901760
        %v989 = vsub.f32 %v256, %v988
        %v990 = vand.u32 %v989, 4294901760
        %991 = vmatpush2.msra.mxu0 %v990
        %992 = vmatprep.subr.mxu0 0.0
        %v993 = vand.u32 %v255, 4294901760
        %v994 = vsub.f32 %v255, %v993
        %v995 = vand.u32 %v994, 4294901760
        %996 = vmatpush2.msra.mxu0 %v995
        %997 = vmatprep.subr.mxu0 0.0
        %v998 = vand.u32 %v254, 4294901760
        %v999 = vsub.f32 %v254, %v998
        %v1000 = vand.u32 %v999, 4294901760
        %1001 = vmatpush2.msra.mxu0 %v1000
        %1002 = vmatprep.subr.mxu0 0.0
        %v1003 = vand.u32 %v253, 4294901760
        %v1004 = vsub.f32 %v253, %v1003
        %v1005 = vand.u32 %v1004, 4294901760
        %1006 = vmatpush2.msra.mxu0 %v1005
        %1007 = vmatprep.subr.mxu0 0.0
        %v1008 = vand.u32 %v252, 4294901760
        %v1009 = vsub.f32 %v252, %v1008
        %v1010 = vand.u32 %v1009, 4294901760
        %1011 = vmatpush2.msra.mxu0 %v1010
        %1012 = vmatprep.subr.mxu0 0.0
        %v1013 = vand.u32 %v251, 4294901760
        %v1014 = vsub.f32 %v251, %v1013
        %v1015 = vand.u32 %v1014, 4294901760
        %1016 = vmatpush2.msra.mxu0 %v1015
        %1017 = vmatprep.subr.mxu0 0.0
        %v1018 = vand.u32 %v250, 4294901760
        %v1019 = vsub.f32 %v250, %v1018
        %v1020 = vand.u32 %v1019, 4294901760
        %1021 = vmatpush2.msra.mxu0 %v1020
        %1022 = vmatprep.subr.mxu0 0.0
        %v1023 = vand.u32 %v249, 4294901760
        %v1024 = vsub.f32 %v249, %v1023
        %v1025 = vand.u32 %v1024, 4294901760
        %1026 = vmatpush2.msra.mxu0 %v1025
        %1027 = vmatprep.subr.mxu0 0.0
        %v1028 = vand.u32 %v248, 4294901760
        %v1029 = vsub.f32 %v248, %v1028
        %v1030 = vand.u32 %v1029, 4294901760
        %1031 = vmatpush2.msra.mxu0 %v1030
        %1032 = vmatprep.subr.mxu0 0.0
        %v1033 = vand.u32 %v247, 4294901760
        %v1034 = vsub.f32 %v247, %v1033
        %v1035 = vand.u32 %v1034, 4294901760
        %1036 = vmatpush2.msra.mxu0 %v1035
        %1037 = vmatprep.subr.mxu0 0.0
        %v1038 = vand.u32 %v246, 4294901760
        %v1039 = vsub.f32 %v246, %v1038
        %v1040 = vand.u32 %v1039, 4294901760
        %1041 = vmatpush2.msra.mxu0 %v1040
        %1042 = vmatprep.subr.mxu0 0.0
        %v1043 = vand.u32 %v245, 4294901760
        %v1044 = vsub.f32 %v245, %v1043
        %v1045 = vand.u32 %v1044, 4294901760
        %1046 = vmatpush2.msra.mxu0 %v1045
        %1047 = vmatprep.subr.mxu0 0.0
        %v1048 = vand.u32 %v244, 4294901760
        %v1049 = vsub.f32 %v244, %v1048
        %v1050 = vand.u32 %v1049, 4294901760
        %1051 = vmatpush2.msra.mxu0 %v1050
        %v1052 = vand.u32 %v225, 4294901760
        %1053 = vmatprep.mubr.f32.mxu0 %v1052
        %v1054 = vand.u32 %v224, 4294901760
        %1055 = vmatmul.mubr.f32.gmra.mxu0 %v1054
        %v1056 = vpop.f32.mrf.mxu0
        %v1057 = vadd.f32 %v878, %v1056
        %v1058 = vpop.f32.mrf.mxu0
        %v1059 = vand.u32 %v227, 4294901760
        %1060 = vmatprep.mubr.f32.mxu0 %v1059
        %v1061 = vand.u32 %v226, 4294901760
        %1062 = vmatmul.mubr.f32.gmra.mxu0 %v1061
        %v1063 = vpop.f32.mrf.mxu0
        %v1064 = vadd.f32 %v889, %v1063
        %v1065 = vpop.f32.mrf.mxu0
        %1066 = vdwg.mxu0
        %1067 = vmatprep.subr.mxu0 0.0
        %v1068 = vand.u32 %v243, 4294901760
        %1069 = vmatpush1.msra.mxu0 %v1068
        %1070 = vmatprep.subr.mxu0 0.0
        %v1071 = vand.u32 %v242, 4294901760
        %1072 = vmatpush1.msra.mxu0 %v1071
        %1073 = vmatprep.subr.mxu0 0.0
        %v1074 = vand.u32 %v241, 4294901760
        %1075 = vmatpush1.msra.mxu0 %v1074
        %1076 = vmatprep.subr.mxu0 0.0
        %v1077 = vand.u32 %v240, 4294901760
        %1078 = vmatpush1.msra.mxu0 %v1077
        %1079 = vmatprep.subr.mxu0 0.0
        %v1080 = vand.u32 %v239, 4294901760
        %1081 = vmatpush1.msra.mxu0 %v1080
        %1082 = vmatprep.subr.mxu0 0.0
        %v1083 = vand.u32 %v238, 4294901760
        %1084 = vmatpush1.msra.mxu0 %v1083
        %1085 = vmatprep.subr.mxu0 0.0
        %v1086 = vand.u32 %v237, 4294901760
        %1087 = vmatpush1.msra.mxu0 %v1086
        %1088 = vmatprep.subr.mxu0 0.0
        %v1089 = vand.u32 %v236, 4294901760
        %1090 = vmatpush1.msra.mxu0 %v1089
        %1091 = vmatprep.subr.mxu0 0.0
        %v1092 = vand.u32 %v235, 4294901760
        %1093 = vmatpush1.msra.mxu0 %v1092
        %1094 = vmatprep.subr.mxu0 0.0
        %v1095 = vand.u32 %v234, 4294901760
        %1096 = vmatpush1.msra.mxu0 %v1095
        %1097 = vmatprep.subr.mxu0 0.0
        %v1098 = vand.u32 %v233, 4294901760
        %1099 = vmatpush1.msra.mxu0 %v1098
        %1100 = vmatprep.subr.mxu0 0.0
        %v1101 = vand.u32 %v232, 4294901760
        %1102 = vmatpush1.msra.mxu0 %v1101
        %1103 = vmatprep.subr.mxu0 0.0
        %v1104 = vand.u32 %v231, 4294901760
        %1105 = vmatpush1.msra.mxu0 %v1104
        %1106 = vmatprep.subr.mxu0 0.0
        %v1107 = vand.u32 %v230, 4294901760
        %1108 = vmatpush1.msra.mxu0 %v1107
        %1109 = vmatprep.subr.mxu0 0.0
        %v1110 = vand.u32 %v229, 4294901760
        %1111 = vmatpush1.msra.mxu0 %v1110
        %1112 = vmatprep.subr.mxu0 0.0
        %v1113 = vand.u32 %v228, 4294901760
        %1114 = vmatpush1.msra.mxu0 %v1113
        %1115 = vmatprep.subr.mxu0 0.0
        %v1116 = vand.u32 %v259, 4294901760
        %1117 = vmatpush2.msra.mxu0 %v1116
        %1118 = vmatprep.subr.mxu0 0.0
        %v1119 = vand.u32 %v258, 4294901760
        %1120 = vmatpush2.msra.mxu0 %v1119
        %1121 = vmatprep.subr.mxu0 0.0
        %v1122 = vand.u32 %v257, 4294901760
        %1123 = vmatpush2.msra.mxu0 %v1122
        %1124 = vmatprep.subr.mxu0 0.0
        %v1125 = vand.u32 %v256, 4294901760
        %1126 = vmatpush2.msra.mxu0 %v1125
        %1127 = vmatprep.subr.mxu0 0.0
        %v1128 = vand.u32 %v255, 4294901760
        %1129 = vmatpush2.msra.mxu0 %v1128
        %1130 = vmatprep.subr.mxu0 0.0
        %v1131 = vand.u32 %v254, 4294901760
        %1132 = vmatpush2.msra.mxu0 %v1131
        %1133 = vmatprep.subr.mxu0 0.0
        %v1134 = vand.u32 %v253, 4294901760
        %1135 = vmatpush2.msra.mxu0 %v1134
        %1136 = vmatprep.subr.mxu0 0.0
        %v1137 = vand.u32 %v252, 4294901760
        %1138 = vmatpush2.msra.mxu0 %v1137
        %1139 = vmatprep.subr.mxu0 0.0
        %v1140 = vand.u32 %v251, 4294901760
        %1141 = vmatpush2.msra.mxu0 %v1140
        %1142 = vmatprep.subr.mxu0 0.0
        %v1143 = vand.u32 %v250, 4294901760
        %1144 = vmatpush2.msra.mxu0 %v1143
        %1145 = vmatprep.subr.mxu0 0.0
        %v1146 = vand.u32 %v249, 4294901760
        %1147 = vmatpush2.msra.mxu0 %v1146
        %1148 = vmatprep.subr.mxu0 0.0
        %v1149 = vand.u32 %v248, 4294901760
        %1150 = vmatpush2.msra.mxu0 %v1149
        %1151 = vmatprep.subr.mxu0 0.0
        %v1152 = vand.u32 %v247, 4294901760
        %1153 = vmatpush2.msra.mxu0 %v1152
        %1154 = vmatprep.subr.mxu0 0.0
        %v1155 = vand.u32 %v246, 4294901760
        %1156 = vmatpush2.msra.mxu0 %v1155
        %1157 = vmatprep.subr.mxu0 0.0
        %v1158 = vand.u32 %v245, 4294901760
        %1159 = vmatpush2.msra.mxu0 %v1158
        %1160 = vmatprep.subr.mxu0 0.0
        %v1161 = vand.u32 %v244, 4294901760
        %1162 = vmatpush2.msra.mxu0 %v1161
        %v1163 = vand.u32 %v225, 4294901760
        %1164 = vmatprep.mubr.f32.mxu0 %v1163
        %v1165 = vand.u32 %v224, 4294901760
        %1166 = vmatmul.mubr.f32.gmra.mxu0 %v1165
        %v1167 = vpop.f32.mrf.mxu0
        %v1168 = vadd.f32 %v1057, %v1167
        %v1169 = vpop.f32.mrf.mxu0
        %v1170 = vand.u32 %v227, 4294901760
        %1171 = vmatprep.mubr.f32.mxu0 %v1170
        %v1172 = vand.u32 %v226, 4294901760
        %1173 = vmatmul.mubr.f32.gmra.mxu0 %v1172
        %v1174 = vpop.f32.mrf.mxu0
        %v1175 = vadd.f32 %v1064, %v1174
        %v1176 = vpop.f32.mrf.mxu0
        %1177 = vdwg.mxu0
        %v1178 = vmul.f32 %v1168, 1.442695
        %v1179 = vpow.pop %v1178
        %v1180 = vmul.f32 %v1175, 1.442695
        %v1181 = vpow.pop %v1180
        %s1182 = sld [smem:[#allocation2]]
        %v1183 = vsub.f32 0.0, %v1179
        %v1184 = vsub.f32 0.0, %v1181
        %v1185 = vmul.f32 %v1183, 1.442695
        %v1186 = vpow.pop %v1185
        %v1187 = vmul.f32 %v1184, 1.442695
        %v1188 = vpow.pop %v1187
        %v1189 = vstv %s1182
        %v1190 = vmul.f32 %v1189, %v1186
        %v1191 = vmul.f32 %v1189, %v1188
        %v1192 = vsub.f32 1.0, %v1190
        %v1193 = vsub.f32 1.0, %v1191
        %1194 = vst [vmem:[%s212] sm:$0xff] %v1192
        %1195 = vst [vmem:[%s212 + $0x8] sm:$0xff] %v1193
        %s1196 = sand.u32 %s98, 1
        %s1197 = scalar_lea.sflag [#allocation5], %s1196
        %s1198 = sand.u32 %s98, 1
        %s1199 = smul.addr %s1198, 16
        %s1200 = scalar_lea.vmem [#allocation8], %s1199
        // Predicated region
        $region41: #{tpu_custom_call.1} parent=31 // pred_check
          %p1201 = pneg %p108
        $region42: #{tpu_custom_call.1} parent=31 // pred_check_branch
          %1203 = sbr.rel (%p1201) target = $region44
        $region43: #{tpu_custom_call.1} parent=31 // pred_region
          %s1204 = smul.u32 2, %s22
          %s1205 = ssub.s32 5, %s1204
          %p1206 = scmp.lt.s32.totalorder %s1205, 2
          %s1207 = scalar_select %p1206, %s1205, 2
          %s1208 = smul.u32 128, %s1207
          %s1210 = ssub.s32 256, %s1208
          %1211 = vsyncadd %s1197, %s1210
          %p1212 = scmp.ne.s32.totalorder 0, %s1208
          %s1213 = smul.addr %s1204, 128
          %s1214 = scalar_lea.hbm %s3, %s1213
          %s1215 = smul.u32 8, %s1207
          %s1216 = sshll.u32 %s1200, 4
          %s1217 = int_to_ptr.vmem [resolvable:$true] %s1216
          %s1218 = sshll.u32 %s1215, 4
          %1222 = dma.vmem_to_hbm [thread:$0]  (%p1212), %s1217, %s1218, %s1214, %s1197, 128, 128, 8
        $region44: #{tpu_custom_call.1} parent=31 // pred_fallthru
          _
      $region32: #{tpu_custom_call.1} parent=5 // pred_fallthru
        _
      %p1223 = scmp.le.s32.totalorder 2, %s17
      // Predicated region
      $region45: #{tpu_custom_call.1} parent=5 // pred_check
        %p1224 = pneg %p1223
      $region46: #{tpu_custom_call.1} parent=5 // pred_check_branch
        %1226 = sbr.rel (%p1224) target = $region48
      $region47: #{tpu_custom_call.1} parent=5 // pred_region
        %s1227 = ssub.s32 %s17, 2
        // Predicated region
        $region49: #{tpu_custom_call.1} parent=47 // pred_check
          %p1228 = pneg %p114
        $region50: #{tpu_custom_call.1} parent=47 // pred_check_branch
          %1230 = sbr.rel (%p1228) target = $region52
        $region51: #{tpu_custom_call.1} parent=47 // pred_region
          %s1231 = sand.u32 %s99, 1
          %s1232 = scalar_lea.sflag [#allocation5], %s1231
          %s1233 = sand.u32 %s99, 1
          %s1234 = smul.addr %s1233, 16
          %s1235 = scalar_lea.vmem [#allocation8], %s1234
          %1236 = dma.done %s1232, 256
        $region52: #{tpu_custom_call.1} parent=47 // pred_fallthru
          _
      $region48: #{tpu_custom_call.1} parent=5 // pred_fallthru
        _
    $region6: #{tpu_custom_call.1} parent=1 // loop_footer
      %s21 = sadd.s32 1, %s17
    $region7: #{tpu_custom_call.1} parent=1 // loop_footer_branch
      %16 = sbr.rel target = $region3
    $region8: #{tpu_custom_call.1} parent=1 // loop_exit
      _
    %1237 = vsyncpa [#allocation4], 1
    %s1238 = scalar_lea.sflag [#allocation4], 1
    %1239 = vsyncpa %s1238, 1
    %1240 = vsyncpa [#allocation7], 1
    %1241 = vsyncpa [#allocation5], 1
    %s1242 = scalar_lea.sflag [#allocation5], 1
    %1243 = vsyncpa %s1242, 1

</llo_original>
